<compile_context>
chip_gen: v5e
topology: v5e:2x2
jax: 0.10.0
libtpu: 0.0.40
codegen_flags: <defaults>
</compile_context>

<pallas_src>
import functools
import math

import jax
import jax.numpy as jnp
from jax import lax
from jax.experimental import pallas as pl
from jax.experimental.pallas import tpu as pltpu

LANES = 128


def _round_up(x, m):
    return ((x + m - 1) // m) * m


def _sublane_tile(dtype):
    """Native sublane packing for the dtype: 8 (32-bit), 16 (16-bit), 32 (8-bit)."""
    itemsize = jnp.dtype(dtype).itemsize
    if itemsize >= 4:
        return 8
    if itemsize == 2:
        return 16
    return 32


def _tpu_config():
    """Per-generation (max_row_tile, n_split_max).

    Block bytes = row_tile * 128 * 4 (f32).  Budgets (double-buffered, worst
    path = 3 arrays on 'none'):
      v5e:  2048 rows -> 1 MiB blocks ->  6 MiB  (<= 16 MiB default scoped VMEM)
      v6e:  4096 rows -> 2 MiB blocks -> 12 MiB  (<= 32 MiB default)
      v7x:  8192 rows -> 4 MiB blocks -> 24 MiB  (<= 32 MiB default, 64 MiB phys)
    n_split=2 only on multi-TC chips (v7x); it is a plain serial loop on
    v5e/v6e with zero upside.
    """
    kind = ""
    try:
        kind = jax.devices()[0].device_kind.lower()
    except Exception:
        pass
    if "v7" in kind or "7x" in kind:
        return 8192, 2
    if "v6" in kind:
        return 4096, 1
    return 2048, 1  # v5e / unknown: conservative


def _to_slab(x, g):
    """Return a (R, 128) 2-D view of x suitable for the kernel.

    Zero-copy (pure metadata reshape) whenever x.size is a multiple of 128
    and there is at least one full sublane tile of rows -- the common case
    for NN tensors.  Otherwise pads once to the minimal (g, 128) granularity
    (only tiny or lane-unaligned tensors hit this).
    """
    n = x.size
    rows = pl.cdiv(n, LANES)
    flat = x.reshape(-1)
    if n == rows * LANES and rows >= g:
        return flat.reshape(rows, LANES)  # zero-copy
    # TODO(synk): a fully copy-free path for lane-unaligned element counts
    # would need manual DMA over the 1-D slab (memory_space=pl.ANY).
    rows_p = max(_round_up(rows, g), g)
    flat = jnp.pad(flat, (0, rows_p * LANES - n))  # zeros; masked in-kernel
    return flat.reshape(rows_p, LANES)


def _rmse_partial_kernel(p_ref, t_ref, o_ref, *, eps, n_total, row_tile, steps,
                         acc_rows, mask_needed):
    """Accumulate an (acc_rows, 128) block of partial sums of sqrt((p-t)^2+eps).

    Grid = (n_split, steps); the output block index depends only on the
    leading "parallel" axis, so it stays resident across the inner
    "arbitrary" reduction axis and acts as the accumulator.  Ragged tails
    (partial trailing input blocks) are zeroed via a mask on the global flat
    element index; n_total is a static Python constant.
    """
    c = pl.program_id(0)
    i = pl.program_id(1)

    @pl.when(i == 0)
    def _():
        o_ref[...] = jnp.zeros_like(o_ref)

    p = p_ref[...].astype(jnp.float32)
    t = t_ref[...].astype(jnp.float32)
    d = p - t
    elem = jnp.sqrt(d * d + eps)

    if mask_needed:
        # Global flat index of every element in this block (int32; assumes
        # n_total < 2**31 elements).
        row0 = (c * steps + i) * row_tile
        row_idx = lax.broadcasted_iota(jnp.int32, elem.shape, 0)
        lane_idx = lax.broadcasted_iota(jnp.int32, elem.shape, 1)
        flat_idx = (row0 + row_idx) * LANES + lane_idx
        elem = jnp.where(flat_idx < n_total, elem, 0.0)

    # Fold (row_tile, 128) onto an (acc_rows, 128) slab with VPU adds only
    # (no cross-lane XLU work); the final scalar reduce happens in the
    # wrapper.  acc_rows up to 32 keeps the per-step add chain shallow.
    o_ref[...] += elem.reshape(-1, acc_rows, LANES).sum(axis=0)


def _rmse_elem_kernel(p_ref, t_ref, o_ref, *, eps):
    p = p_ref[...].astype(jnp.float32)
    t = t_ref[...].astype(jnp.float32)
    d = p - t
    o_ref[...] = jnp.sqrt(d * d + eps).astype(o_ref.dtype)


def rmse_loss(y_pred, y_true, *, reduction="mean", eps=1e-9):
    """Pallas implementation of RMSELoss.forward (sqrt((p-t)^2+eps), then reduce)."""
    assert y_pred.shape == y_true.shape
    orig_shape = y_pred.shape
    n_total = int(math.prod(orig_shape)) if orig_shape else 1

    g = _sublane_tile(y_pred.dtype)
    max_row_tile, n_split_max = _tpu_config()

    p2d = _to_slab(y_pred, g)
    t2d = _to_slab(y_true, g)
    R = p2d.shape[0]

    # Largest block that fits the per-generation budget, is a multiple of the
    # dtype's sublane tile, and never exceeds the array rows (so every block
    # start is in bounds; the trailing block may still be partial).
    row_tile = min(max_row_tile, (R // g) * g)
    blocks = pl.cdiv(R, row_tile)

    if reduction in ("mean", "sum"):
        # Megacore split only on multi-TC chips, only with enough (even) work.
        n_split = (n_split_max
                   if (n_split_max > 1 and blocks >= 2 * n_split_max
                       and blocks % n_split_max == 0)
                   else 1)
        steps = pl.cdiv(blocks, n_split)
        coverage = n_split * steps * row_tile * LANES
        mask_needed = coverage != n_total

        # Wider accumulator -> shallower add chain (matters on v7x).
        acc_rows = 32 if row_tile % 32 == 0 else (16 if row_tile % 16 == 0 else 8)

        in_map = lambda c, i: (c * steps + i, 0)
        partials = pl.pallas_call(
            functools.partial(_rmse_partial_kernel, eps=eps, n_total=n_total,
                              row_tile=row_tile, steps=steps, acc_rows=acc_rows,
                              mask_needed=mask_needed),
            out_shape=jax.ShapeDtypeStruct((n_split * acc_rows, LANES),
                                           jnp.float32),
            grid_spec=pltpu.PrefetchScalarGridSpec(
                num_scalar_prefetch=0,
                grid=(n_split, steps),
                in_specs=[
                    pl.BlockSpec((row_tile, LANES), in_map),
                    pl.BlockSpec((row_tile, LANES), in_map),
                ],
                # One resident (acc_rows, 128) accumulator block per split.
                out_specs=pl.BlockSpec((acc_rows, LANES), lambda c, i: (c, 0)),
            ),
            compiler_params=pltpu.CompilerParams(
                dimension_semantics=("parallel", "arbitrary")),
        )(p2d, t2d)

        total = jnp.sum(partials)
        if reduction == "mean":
            total = total / jnp.float32(n_total)
        return total.astype(y_pred.dtype)

    elif reduction == "none":
        out2d = pl.pallas_call(
            functools.partial(_rmse_elem_kernel, eps=eps),
            out_shape=jax.ShapeDtypeStruct((R, LANES), y_pred.dtype),
            grid_spec=pltpu.PrefetchScalarGridSpec(
                num_scalar_prefetch=0,
                grid=(blocks,),
                in_specs=[
                    pl.BlockSpec((row_tile, LANES), lambda i: (i, 0)),
                    pl.BlockSpec((row_tile, LANES), lambda i: (i, 0)),
                ],
                out_specs=pl.BlockSpec((row_tile, LANES), lambda i: (i, 0)),
            ),
            compiler_params=pltpu.CompilerParams(
                dimension_semantics=("parallel",)),
        )(p2d, t2d)
        if R * LANES == n_total:
            return out2d.reshape(orig_shape)          # zero-copy path
        return out2d.reshape(-1)[:n_total].reshape(orig_shape)

    else:
        raise ValueError(f"unknown reduction: {reduction}")


if __name__ == "__main__":
    key = jax.random.PRNGKey(0)
    k1, k2, k3, k4, k5, k6 = jax.random.split(key, 6)
    eps = 1e-9

    # Small NCHW input consistent with the module's typical use.
    x_shape = (2, 4, 16, 16)        # 2048 elements -> zero-copy, no masking
    y_pred = jax.random.normal(k1, x_shape, dtype=jnp.float32)
    y_true = jax.random.normal(k2, x_shape, dtype=jnp.float32)

    # reduction='mean' (module default)
    loss = jax.block_until_ready(rmse_loss(y_pred, y_true, reduction="mean", eps=eps))
    ref = jnp.mean(jnp.sqrt((y_pred - y_true) ** 2 + eps))
    assert jnp.allclose(loss, ref, rtol=1e-5, atol=1e-6), (loss, ref)

    # reduction='sum'
    loss_s = jax.block_until_ready(rmse_loss(y_pred, y_true, reduction="sum", eps=eps))
    ref_s = jnp.sum(jnp.sqrt((y_pred - y_true) ** 2 + eps))
    assert jnp.allclose(loss_s, ref_s, rtol=1e-5, atol=1e-4), (loss_s, ref_s)

    # reduction='none'
    loss_n = jax.block_until_ready(rmse_loss(y_pred, y_true, reduction="none", eps=eps))
    ref_n = jnp.sqrt((y_pred - y_true) ** 2 + eps)
    assert loss_n.shape == x_shape
    assert jnp.allclose(loss_n, ref_n, rtol=1e-6, atol=1e-6)

    # 128-aligned element count but ragged row count -> zero-copy + in-kernel mask.
    w_shape = (20, 128)
    wp = jax.random.normal(k5, w_shape, dtype=jnp.float32)
    wt = jax.random.normal(k6, w_shape, dtype=jnp.float32)
    loss_w = jax.block_until_ready(rmse_loss(wp, wt, reduction="mean", eps=eps))
    ref_w = jnp.mean(jnp.sqrt((wp - wt) ** 2 + eps))
    assert jnp.allclose(loss_w, ref_w, rtol=1e-5, atol=1e-6), (loss_w, ref_w)

    # Lane-unaligned element count -> minimal pad + in-kernel mask.
    z_shape = (3, 5, 7)
    zp = jax.random.normal(k3, z_shape, dtype=jnp.float32)
    zt = jax.random.normal(k4, z_shape, dtype=jnp.float32)
    loss_r = jax.block_until_ready(rmse_loss(zp, zt, reduction="mean", eps=eps))
    ref_r = jnp.mean(jnp.sqrt((zp - zt) ** 2 + eps))
    assert jnp.allclose(loss_r, ref_r, rtol=1e-4, atol=1e-5), (loss_r, ref_r)
    loss_rn = jax.block_until_ready(rmse_loss(zp, zt, reduction="none", eps=eps))
    ref_rn = jnp.sqrt((zp - zt) ** 2 + eps)
    assert loss_rn.shape == z_shape
    assert jnp.allclose(loss_rn, ref_rn, rtol=1e-6, atol=1e-6)

    print("KERNEL_OK")
</pallas_src>

<mosaic_0001>
module attributes {stable_mosaic.version = 11 : i64} {
  func.func @_rmse_partial_kernel(%arg0: i32, %arg1: i32, %arg2: memref<16x128xf32, #tpu.memory_space<vmem>>, %arg3: memref<16x128xf32, #tpu.memory_space<vmem>>, %arg4: memref<16x128xf32, #tpu.memory_space<vmem>>) attributes {dimension_semantics = [#tpu.dimension_semantics<parallel>, #tpu.dimension_semantics<arbitrary>], iteration_bounds = array<i64: 1, 1>, scalar_prefetch = 0 : i64, scratch_operands = 0 : i64, tpu.core_type = #tpu.core_type<tc>, window_params = [{transform_indices = @transform_0, window_bounds = array<i64: 16, 128>}, {transform_indices = @transform_1, window_bounds = array<i64: 16, 128>}, {transform_indices = @transform_2, window_bounds = array<i64: 16, 128>}]} {
    %c0_i32 = arith.constant 0 : i32
    %0 = arith.cmpi eq, %arg1, %c0_i32 : i32
    %1 = arith.extui %0 : i1 to i32
    %c0_i32_0 = arith.constant 0 : i32
    %2 = arith.cmpi ne, %1, %c0_i32_0 : i32
    scf.if %2 {
      %cst_9 = arith.constant 0.000000e+00 : f32
      %15 = vector.broadcast %cst_9 : f32 to vector<16x128xf32>
      %c0_10 = arith.constant 0 : index
      %c0_11 = arith.constant 0 : index
      %16 = vector.load %arg4[%c0_10, %c0_11] : memref<16x128xf32, #tpu.memory_space<vmem>>, vector<16x128xf32>
      tpu.vector_store %arg4[%c0_10, %c0_11], %15 {strides = array<i32>} : memref<16x128xf32, #tpu.memory_space<vmem>>, vector<16x128xf32>,
    } else {
    }
    %c0 = arith.constant 0 : index
    %c0_1 = arith.constant 0 : index
    %3 = vector.load %arg2[%c0, %c0_1] : memref<16x128xf32, #tpu.memory_space<vmem>>, vector<16x128xf32>
    %c0_2 = arith.constant 0 : index
    %c0_3 = arith.constant 0 : index
    %4 = vector.load %arg3[%c0_2, %c0_3] : memref<16x128xf32, #tpu.memory_space<vmem>>, vector<16x128xf32>
    %5 = arith.subf %3, %4 : vector<16x128xf32>
    %6 = arith.mulf %5, %5 : vector<16x128xf32>
    %cst = arith.constant 9.99999971E-10 : f32
    %7 = vector.broadcast %cst : f32 to vector<16x128xf32>
    %8 = arith.addf %6, %7 : vector<16x128xf32>
    %9 = math.sqrt %8 : vector<16x128xf32>
    %c0_4 = arith.constant 0 : index
    %c0_5 = arith.constant 0 : index
    %10 = vector.load %arg4[%c0_4, %c0_5] : memref<16x128xf32, #tpu.memory_space<vmem>>, vector<16x128xf32>
    %11 = vector.shape_cast %9 : vector<16x128xf32> to vector<1x16x128xf32>
    %cst_6 = arith.constant dense<0.000000e+00> : vector<16x128xf32>
    %12 = vector.multi_reduction <add>, %11, %cst_6 [0] : vector<1x16x128xf32> to vector<16x128xf32>
    %13 = arith.addf %10, %12 : vector<16x128xf32>
    %c0_7 = arith.constant 0 : index
    %c0_8 = arith.constant 0 : index
    %14 = vector.load %arg4[%c0_7, %c0_8] : memref<16x128xf32, #tpu.memory_space<vmem>>, vector<16x128xf32>
    tpu.vector_store %arg4[%c0_7, %c0_8], %13 {strides = array<i32>} : memref<16x128xf32, #tpu.memory_space<vmem>>, vector<16x128xf32>,
    return
  }
  func.func @transform_0(%arg0: i32, %arg1: i32) -> (i32, i32) {
    %c1_i32 = arith.constant 1 : i32
    %0 = arith.muli %arg0, %c1_i32 : i32
    %1 = arith.addi %0, %arg1 : i32
    %c0_i32 = arith.constant 0 : i32
    %c0_i32_0 = arith.constant 0 : i32
    return %1, %c0_i32 : i32, i32
  }
  func.func @transform_1(%arg0: i32, %arg1: i32) -> (i32, i32) {
    %c1_i32 = arith.constant 1 : i32
    %0 = arith.muli %arg0, %c1_i32 : i32
    %1 = arith.addi %0, %arg1 : i32
    %c0_i32 = arith.constant 0 : i32
    %c0_i32_0 = arith.constant 0 : i32
    return %1, %c0_i32 : i32, i32
  }
  func.func @transform_2(%arg0: i32, %arg1: i32) -> (i32, i32) {
    %c0_i32 = arith.constant 0 : i32
    %c0_i32_0 = arith.constant 0 : i32
    return %arg0, %c0_i32 : i32, i32
  }
}

</mosaic_0001>

<llo_original>
// kernel: tpu_custom_call.1
$region0: #{tpu_custom_call.1}
  #allocation0 [shape = 'u32[]', space=smem, size = 0x4, offset = 0x4, fixed_abs, tag = 'smem constant byte address 0x4 - core index']
  #allocation1 [shape = 'u32[72,128]{1,0:T(1,128)}', space=vmem, size = 0x9000, scoped, tag = 'internal scratch']
  %s0 = inlined_call_operand.hbm [shape: f32[16,128], index: 0, kind: input, shape index: {}]
  %s1 = inlined_call_operand.hbm [shape: f32[16,128], index: 1, kind: input, shape index: {}]
  %s2 = inlined_call_operand.hbm [shape: f32[16,128], index: 2, kind: output, shape index: {}]
  %s3 = sld [smem:[#allocation0]]
  $region30: #{tpu_custom_call.1} parent=0
    _
  %s5 = ssub.s32 1, %s3
  %s6 = scalar_select 0, %s5, %s3
  $region1: #{tpu_custom_call.1} parent=0
    #allocation2 [shape = 'u8[8192]{0}', space=vmem, size = 0x2000, scoped, tag = 'input window, operand 0, single buffered']
    #allocation3 [shape = 's32[1]{0}', space=sflag, size = 0x4, scoped, tag = 'scoped memory for tpu_custom_call.1']
    #allocation4 [shape = 's32[1]{0}', space=sflag, size = 0x4, scoped, tag = 'scoped memory for tpu_custom_call.1']
    #allocation5 [shape = 'u8[8192]{0}', space=vmem, size = 0x2000, scoped, tag = 'input window, operand 1, single buffered']
    #allocation6 [shape = 's32[1]{0}', space=sflag, size = 0x4, scoped, tag = 'scoped memory for tpu_custom_call.1']
    #allocation7 [shape = 'u8[8192]{0}', space=vmem, size = 0x2000, scoped, tag = 'output window, operand 0, single buffered']
    %7 = vsyncpa [#allocation3], 0
    %8 = vsyncpa [#allocation6], 0
    %9 = vsyncpa [#allocation4], 0
    // Predicated region
    $region2: #{tpu_custom_call.1} parent=1 // pred_check
      _
    $region3: #{tpu_custom_call.1} parent=1 // pred_check_branch
      %11 = sbr.rel (0) target = $region5
    $region4: #{tpu_custom_call.1} parent=1 // pred_region
      %s12 = sadd.s32 0, 0
      %s13 = smul.u32 2, %s12
      %15 = vsyncadd [#allocation3], 0
      %s16 = smul.addr %s13, 8
      %s17 = scalar_lea.hbm %s0, %s16
      %s18 = sshll.u32 %s17, 4
      %s19 = int_to_ptr.hbm [resolvable:$true] %s18
      %s20 = sshll.u32 [#allocation2], 4
      %s21 = int_to_ptr.vmem [resolvable:$true] %s20
      %26 = dma.hbm_to_vmem [thread:$0]  %s19, 256, %s21, [#allocation3], 128, 128, 8
    $region5: #{tpu_custom_call.1} parent=1 // pred_fallthru
      _
    // Predicated region
    $region6: #{tpu_custom_call.1} parent=1 // pred_check
      _
    $region7: #{tpu_custom_call.1} parent=1 // pred_check_branch
      %28 = sbr.rel (0) target = $region9
    $region8: #{tpu_custom_call.1} parent=1 // pred_region
      %s29 = sadd.s32 0, 0
      %s30 = smul.u32 2, %s29
      %32 = vsyncadd [#allocation6], 0
      %s33 = smul.addr %s30, 8
      %s34 = scalar_lea.hbm %s1, %s33
      %s35 = sshll.u32 %s34, 4
      %s36 = int_to_ptr.hbm [resolvable:$true] %s35
      %s37 = sshll.u32 [#allocation5], 4
      %s38 = int_to_ptr.vmem [resolvable:$true] %s37
      %43 = dma.hbm_to_vmem [thread:$0]  %s36, 256, %s38, [#allocation6], 128, 128, 8
    $region9: #{tpu_custom_call.1} parent=1 // pred_fallthru
      _
    // Predicated region
    $region10: #{tpu_custom_call.1} parent=1 // pred_check
      _
    $region11: #{tpu_custom_call.1} parent=1 // pred_check_branch
      %45 = sbr.rel (0) target = $region13
    $region12: #{tpu_custom_call.1} parent=1 // pred_region
      %47 = dma.done [#allocation3], 256
    $region13: #{tpu_custom_call.1} parent=1 // pred_fallthru
      _
    // Predicated region
    $region14: #{tpu_custom_call.1} parent=1 // pred_check
      _
    $region15: #{tpu_custom_call.1} parent=1 // pred_check_branch
      %49 = sbr.rel (0) target = $region17
    $region16: #{tpu_custom_call.1} parent=1 // pred_region
      %51 = dma.done [#allocation6], 256
    $region17: #{tpu_custom_call.1} parent=1 // pred_fallthru
      _
    %s52 = sadd.s32 0, 0
    %s53 = smul.u32 2, %s52
    %s54 = sadd.s32 0, 0
    %s55 = smul.u32 2, %s54
    %p56 = scmp.eq.s32.totalorder 0, 0
    // Predicated region
    $region18: #{tpu_custom_call.1} parent=1 // pred_check
      %p57 = pneg %p56
    $region19: #{tpu_custom_call.1} parent=1 // pred_check_branch
      %59 = sbr.rel (%p57) target = $region21
    $region20: #{tpu_custom_call.1} parent=1 // pred_region
      %60 = vst [vmem:[#allocation7] sm:$0xff] 0.0
      %61 = vst [vmem:[#allocation7 + $0x8] sm:$0xff] 0.0
    $region21: #{tpu_custom_call.1} parent=1 // pred_fallthru
      _
    %v62 = vld [vmem:[#allocation2] sm:$0xff]
    %v63 = vld [vmem:[#allocation2 + $0x8] sm:$0xff]
    %v64 = vld [vmem:[#allocation5] sm:$0xff]
    %v65 = vld [vmem:[#allocation5 + $0x8] sm:$0xff]
    %v66 = vsub.f32 %v62, %v64
    %v67 = vsub.f32 %v63, %v65
    %v68 = vmul.f32 %v66, %v66
    %v69 = vmul.f32 %v67, %v67
    %v70 = vadd.f32 %v68, 1e-09
    %v71 = vadd.f32 %v69, 1e-09
    %v72 = vrsqrt.pop %v70
    %v73 = vmul.f32 %v72, %v70
    %v74 = vmul.f32 %v73, %v72
    %v75 = vmul.f32 0.5, %v74
    %v76 = vsub.f32 1.5, %v75
    %v77 = vmul.f32 %v72, %v76
    %v78 = vmul.f32 %v70, %v77
    %vm79 = vcmp.eq.f32.partialorder %v70, inf
    %v80 = vsel %vm79, %v70, %v78
    %vm81 = vcmp.eq.f32.partialorder %v70, 0.0
    %v82 = vand.u32 %v70, 2147483648
    %v83 = vsel %vm81, %v82, %v80
    %v84 = vrsqrt.pop %v71
    %v85 = vmul.f32 %v84, %v71
    %v86 = vmul.f32 %v85, %v84
    %v87 = vmul.f32 0.5, %v86
    %v88 = vsub.f32 1.5, %v87
    %v89 = vmul.f32 %v84, %v88
    %v90 = vmul.f32 %v71, %v89
    %vm91 = vcmp.eq.f32.partialorder %v71, inf
    %v92 = vsel %vm91, %v71, %v90
    %vm93 = vcmp.eq.f32.partialorder %v71, 0.0
    %v94 = vand.u32 %v71, 2147483648
    %v95 = vsel %vm93, %v94, %v92
    %v96 = vld [vmem:[#allocation7] sm:$0xff]
    %v97 = vld [vmem:[#allocation7 + $0x8] sm:$0xff]
    %v98 = vadd.f32 %v83, 0.0
    %v99 = vadd.f32 %v95, 0.0
    %v100 = vadd.f32 %v96, %v98
    %v101 = vadd.f32 %v97, %v99
    %102 = vst [vmem:[#allocation7] sm:$0xff] %v100
    %103 = vst [vmem:[#allocation7 + $0x8] sm:$0xff] %v101
    // Predicated region
    $region22: #{tpu_custom_call.1} parent=1 // pred_check
      _
    $region23: #{tpu_custom_call.1} parent=1 // pred_check_branch
      %105 = sbr.rel (0) target = $region25
    $region24: #{tpu_custom_call.1} parent=1 // pred_region
      %107 = vsyncadd [#allocation4], 0
      %s108 = sshll.u32 [#allocation7], 4
      %s109 = int_to_ptr.vmem [resolvable:$true] %s108
      %s110 = sshll.u32 %s2, 4
      %s111 = int_to_ptr.hbm [resolvable:$true] %s110
      %116 = dma.vmem_to_hbm [thread:$0]  %s109, 256, %s111, [#allocation4], 128, 128, 8
    $region25: #{tpu_custom_call.1} parent=1 // pred_fallthru
      _
    // Predicated region
    $region26: #{tpu_custom_call.1} parent=1 // pred_check
      _
    $region27: #{tpu_custom_call.1} parent=1 // pred_check_branch
      %118 = sbr.rel (0) target = $region29
    $region28: #{tpu_custom_call.1} parent=1 // pred_region
      %120 = dma.done [#allocation4], 256
    $region29: #{tpu_custom_call.1} parent=1 // pred_fallthru
      _
    %121 = vsyncpa [#allocation3], 1
    %122 = vsyncpa [#allocation6], 1
    %123 = vsyncpa [#allocation4], 1

</llo_original>
